<compile_context>
chip_gen: v6e
topology: v6e:2x2x1
jax: 0.10.0
libtpu: 0.0.40
codegen_flags: <defaults>
</compile_context>

<pallas_src>
import functools
import math

import numpy as np
import jax
import jax.numpy as jnp
from jax import lax
from jax.experimental import pallas as pl
from jax.experimental.pallas import tpu as pltpu


def _round_up(n, m):
    return ((n + m - 1) // m) * m


# ----------------------------------------------------------------------------
# Training-mode kernel: one grid step == one virtual (ghost) batch
# ----------------------------------------------------------------------------
def _ghost_bn_train_kernel(x_ref, gamma_ref, beta_ref,
                           y_ref, mean_ref, var_ref,
                           *, batch_size, chunk_rows, eps):
    f32 = jnp.float32
    i = pl.program_id(0)
    x = x_ref[...].astype(f32)                    # (rows_padded, C); padded rows are zero
    rows_padded, _ = x.shape

    # Number of real rows in this virtual batch (the last chunk may be short).
    n_valid = jnp.minimum(chunk_rows, batch_size - i * chunk_rows)
    count = n_valid.astype(f32)

    # Row-validity weights as a (1, rows_padded) vector: the per-channel row
    # reductions become small MXU matmuls (VPU/XLU stay free, padding is exact).
    row_w = (lax.broadcasted_iota(jnp.int32, (1, rows_padded), 1) < n_valid).astype(f32)

    sum_x = jnp.dot(row_w, x, preferred_element_type=f32,
                    precision=lax.Precision.HIGHEST)              # (1, C)
    mean = sum_x / count
    diff = x - mean
    sum_sq = jnp.dot(row_w, diff * diff, preferred_element_type=f32,
                     precision=lax.Precision.HIGHEST)             # (1, C)
    var = sum_sq / count                                          # biased var (BN forward)

    inv = lax.rsqrt(var + eps)                                    # EUP
    y = diff * (inv * gamma_ref[...]) + beta_ref[...]

    # Keep padded tail rows at zero so the output slab stays clean.
    row_ok = lax.broadcasted_iota(jnp.int32, (rows_padded, 1), 0) < n_valid
    y_ref[...] = jnp.where(row_ok, y, 0.0).astype(y_ref.dtype)
    mean_ref[...] = mean
    var_ref[...] = var


# ----------------------------------------------------------------------------
# Eval-mode kernel: running stats folded to a per-channel affine
# ----------------------------------------------------------------------------
def _affine_kernel(x_ref, scale_ref, shift_ref, y_ref):
    y_ref[...] = (x_ref[...] * scale_ref[...] + shift_ref[...]).astype(y_ref.dtype)


# ----------------------------------------------------------------------------
# Wrapper: full GhostBatchNorm.forward semantics
# ----------------------------------------------------------------------------
def ghost_batch_norm(x, gamma, beta, running_mean, running_var, *,
                     virtual_batch_size=None, momentum=0.9, eps=1e-5,
                     training=True):
    """Returns (y, new_running_mean, new_running_var)."""
    B, C = x.shape
    f32 = jnp.float32

    if not training:
        scale = (gamma / jnp.sqrt(running_var + eps)).astype(f32)
        shift = (beta - running_mean * scale).astype(f32)
        rows = _round_up(B, 8)
        tile = min(512, rows)
        rows = _round_up(rows, tile)
        xp = jnp.pad(x, ((0, rows - B), (0, 0)))
        y = pl.pallas_call(
            _affine_kernel,
            grid=(rows // tile,),
            in_specs=[pl.BlockSpec((tile, C), lambda i: (i, 0)),
                      pl.BlockSpec((1, C), lambda i: (0, 0)),
                      pl.BlockSpec((1, C), lambda i: (0, 0))],
            out_specs=pl.BlockSpec((tile, C), lambda i: (i, 0)),
            out_shape=jax.ShapeDtypeStruct((rows, C), x.dtype),
            compiler_params=pltpu.CompilerParams(dimension_semantics=("parallel",)),
        )(xp, scale.reshape(1, C), shift.reshape(1, C))
        return y[:B], running_mean, running_var

    # ---- training: per-virtual-batch statistics (torch.chunk semantics) -----
    if virtual_batch_size is None or virtual_batch_size >= B:
        n_chunks = 1
    else:
        n_chunks = math.ceil(B / virtual_batch_size)
    chunk_rows = math.ceil(B / n_chunks)          # torch.chunk block size
    n_chunks = math.ceil(B / chunk_rows)          # torch.chunk may emit fewer chunks
    rows_padded = _round_up(chunk_rows, 8)        # sublane-aligned row tile

    # Repack rows so each chunk starts at a sublane-aligned offset; padded rows
    # are zero and are masked out of the statistics inside the kernel.
    xp = jnp.pad(x, ((0, n_chunks * chunk_rows - B), (0, 0)))
    xp = xp.reshape(n_chunks, chunk_rows, C)
    xp = jnp.pad(xp, ((0, 0), (0, rows_padded - chunk_rows), (0, 0)))
    xp = xp.reshape(n_chunks * rows_padded, C)

    kernel = functools.partial(_ghost_bn_train_kernel, batch_size=B,
                               chunk_rows=chunk_rows, eps=float(eps))
    y_p, mean_c, var_c = pl.pallas_call(
        kernel,
        grid=(n_chunks,),
        in_specs=[
            pl.BlockSpec((rows_padded, C), lambda i: (i, 0)),    # this chunk's rows
            pl.BlockSpec((1, C), lambda i: (0, 0)),              # gamma (resident)
            pl.BlockSpec((1, C), lambda i: (0, 0)),              # beta  (resident)
        ],
        out_specs=(
            pl.BlockSpec((rows_padded, C), lambda i: (i, 0)),    # normalized rows
            pl.BlockSpec((None, 1, C), lambda i: (i, 0, 0)),     # per-chunk mean
            pl.BlockSpec((None, 1, C), lambda i: (i, 0, 0)),     # per-chunk biased var
        ),
        out_shape=(
            jax.ShapeDtypeStruct((n_chunks * rows_padded, C), x.dtype),
            jax.ShapeDtypeStruct((n_chunks, 1, C), f32),
            jax.ShapeDtypeStruct((n_chunks, 1, C), f32),
        ),
        compiler_params=pltpu.CompilerParams(dimension_semantics=("parallel",)),
    )(xp, gamma.reshape(1, C).astype(f32), beta.reshape(1, C).astype(f32))

    # Undo the row repacking.
    y = y_p.reshape(n_chunks, rows_padded, C)[:, :chunk_rows]
    y = y.reshape(n_chunks * chunk_rows, C)[:B]

    # Sequential running-stat momentum update, exactly as the PyTorch loop does
    # (one BatchNorm1d call per chunk; unbiased variance for the running buffer).
    rm = running_mean.astype(f32)
    rv = running_var.astype(f32)
    for i in range(n_chunks):
        cnt = min(chunk_rows, B - chunk_rows * i)
        unbias = cnt / max(cnt - 1, 1)
        rm = (1.0 - momentum) * rm + momentum * mean_c[i, 0]
        rv = (1.0 - momentum) * rv + momentum * (var_c[i, 0] * unbias)
    return y, rm, rv


# ----------------------------------------------------------------------------
# Pure-JAX reference replicating the PyTorch module
# ----------------------------------------------------------------------------
def ghost_batch_norm_ref(x, gamma, beta, running_mean, running_var, *,
                         virtual_batch_size=None, momentum=0.9, eps=1e-5,
                         training=True):
    B = x.shape[0]
    if not training:
        y = (x - running_mean) / jnp.sqrt(running_var + eps) * gamma + beta
        return y, running_mean, running_var
    if virtual_batch_size is None or virtual_batch_size >= B:
        n_chunks = 1
    else:
        n_chunks = math.ceil(B / virtual_batch_size)
    chunk_rows = math.ceil(B / n_chunks)
    n_chunks = math.ceil(B / chunk_rows)
    ys = []
    rm, rv = running_mean, running_var
    for i in range(n_chunks):
        xc = x[i * chunk_rows: min((i + 1) * chunk_rows, B)]
        n = xc.shape[0]
        mean = jnp.mean(xc, axis=0)
        var = jnp.mean((xc - mean) ** 2, axis=0)          # biased, used for normalization
        ys.append((xc - mean) / jnp.sqrt(var + eps) * gamma + beta)
        rm = (1.0 - momentum) * rm + momentum * mean
        rv = (1.0 - momentum) * rv + momentum * (var * n / max(n - 1, 1))
    return jnp.concatenate(ys, axis=0), rm, rv


# ----------------------------------------------------------------------------
if __name__ == "__main__":
    B, C, VBS = 22, 32, 6        # -> 4 virtual batches of sizes 6, 6, 6, 4
    MOMENTUM, EPS = 0.9, 1e-5

    key = jax.random.PRNGKey(0)
    kx, kg, kb, km, kv = jax.random.split(key, 5)
    x = jax.random.normal(kx, (B, C), jnp.float32) * 2.0 + 0.5
    gamma = jax.random.normal(kg, (C,), jnp.float32) * 0.2 + 1.0
    beta = jax.random.normal(kb, (C,), jnp.float32) * 0.1
    running_mean = jax.random.normal(km, (C,), jnp.float32) * 0.3
    running_var = jax.random.uniform(kv, (C,), jnp.float32, minval=0.5, maxval=1.5)

    cfg = dict(momentum=MOMENTUM, eps=EPS)

    # --- training mode with virtual batches (ghost batch norm proper) ---
    y, rm, rv = ghost_batch_norm(x, gamma, beta, running_mean, running_var,
                                 virtual_batch_size=VBS, training=True, **cfg)
    jax.block_until_ready((y, rm, rv))
    y_r, rm_r, rv_r = ghost_batch_norm_ref(x, gamma, beta, running_mean, running_var,
                                           virtual_batch_size=VBS, training=True, **cfg)
    np.testing.assert_allclose(np.asarray(y), np.asarray(y_r), rtol=1e-4, atol=1e-4)
    np.testing.assert_allclose(np.asarray(rm), np.asarray(rm_r), rtol=1e-4, atol=1e-4)
    np.testing.assert_allclose(np.asarray(rv), np.asarray(rv_r), rtol=1e-4, atol=1e-4)

    # --- training mode, virtual_batch_size=None (plain BatchNorm1d forward) ---
    y2, rm2, rv2 = ghost_batch_norm(x, gamma, beta, running_mean, running_var,
                                    virtual_batch_size=None, training=True, **cfg)
    jax.block_until_ready((y2, rm2, rv2))
    y2_r, rm2_r, rv2_r = ghost_batch_norm_ref(x, gamma, beta, running_mean, running_var,
                                              virtual_batch_size=None, training=True, **cfg)
    np.testing.assert_allclose(np.asarray(y2), np.asarray(y2_r), rtol=1e-4, atol=1e-4)
    np.testing.assert_allclose(np.asarray(rm2), np.asarray(rm2_r), rtol=1e-4, atol=1e-4)
    np.testing.assert_allclose(np.asarray(rv2), np.asarray(rv2_r), rtol=1e-4, atol=1e-4)

    # --- eval mode (running statistics; chunking is a no-op) ---
    y3, _, _ = ghost_batch_norm(x, gamma, beta, running_mean, running_var,
                                virtual_batch_size=VBS, training=False, **cfg)
    jax.block_until_ready(y3)
    y3_r, _, _ = ghost_batch_norm_ref(x, gamma, beta, running_mean, running_var,
                                      virtual_batch_size=VBS, training=False, **cfg)
    np.testing.assert_allclose(np.asarray(y3), np.asarray(y3_r), rtol=1e-4, atol=1e-4)

    print("KERNEL_OK")
</pallas_src>

<mosaic_0001>
module attributes {stable_mosaic.version = 11 : i64} {
  func.func @_ghost_bn_train_kernel(%arg0: i32, %arg1: memref<8x32xf32, #tpu.memory_space<vmem>>, %arg2: memref<1x32xf32, #tpu.memory_space<vmem>>, %arg3: memref<1x32xf32, #tpu.memory_space<vmem>>, %arg4: memref<8x32xf32, #tpu.memory_space<vmem>>, %arg5: memref<1x1x32xf32, #tpu.memory_space<vmem>>, %arg6: memref<1x1x32xf32, #tpu.memory_space<vmem>>) attributes {dimension_semantics = [#tpu.dimension_semantics<parallel>], iteration_bounds = array<i64: 4>, scalar_prefetch = 0 : i64, scratch_operands = 0 : i64, tpu.core_type = #tpu.core_type<tc>, window_params = [{transform_indices = @transform_0, window_bounds = array<i64: 8, 32>}, {pipeline_mode = #tpu.pipeline_mode<synchronous>, transform_indices = @transform_1, window_bounds = array<i64: 1, 32>}, {pipeline_mode = #tpu.pipeline_mode<synchronous>, transform_indices = @transform_2, window_bounds = array<i64: 1, 32>}, {transform_indices = @transform_3, window_bounds = array<i64: 8, 32>}, {transform_indices = @transform_4, window_bounds = array<i64: 1, 1, 32>}, {transform_indices = @transform_5, window_bounds = array<i64: 1, 1, 32>}]} {
    %c0 = arith.constant 0 : index
    %c0_0 = arith.constant 0 : index
    %0 = vector.load %arg1[%c0, %c0_0] : memref<8x32xf32, #tpu.memory_space<vmem>>, vector<8x32xf32>
    %c6_i32 = arith.constant 6 : i32
    %1 = arith.muli %arg0, %c6_i32 : i32
    %c22_i32 = arith.constant 22 : i32
    %2 = arith.subi %c22_i32, %1 : i32
    %c6_i32_1 = arith.constant 6 : i32
    %3 = arith.minsi %c6_i32_1, %2 : i32
    %4 = arith.sitofp %3 : i32 to f32
    %5 = tpu.iota {dimensions = array<i32: 1>} : vector<1x8xi32>
    %6 = vector.broadcast %3 : i32 to vector<1x8xi32>
    %7 = arith.cmpi slt, %5, %6 : vector<1x8xi32>
    %8 = arith.extui %7 : vector<1x8xi1> to vector<1x8xi32>
    %9 = arith.sitofp %8 : vector<1x8xi32> to vector<1x8xf32>
    %cst = arith.constant dense<0.000000e+00> : vector<1x32xf32>
    %10 = tpu.matmul %9, %0, %cst {dimension_numbers = #tpu.dot_dimension_numbers<[1], [0], [0], [1], [0, 0, 1, 1], [], []>, precision = #tpu.contract_precision<fp32>} : vector<1x8xf32>, vector<8x32xf32>, vector<1x32xf32> -> vector<1x32xf32>
    %11 = vector.broadcast %4 : f32 to vector<1x32xf32>
    %12 = arith.divf %10, %11 : vector<1x32xf32>
    %13 = vector.broadcast %12 : vector<1x32xf32> to vector<8x32xf32>
    %14 = arith.subf %0, %13 : vector<8x32xf32>
    %15 = arith.mulf %14, %14 : vector<8x32xf32>
    %cst_2 = arith.constant dense<0.000000e+00> : vector<1x32xf32>
    %16 = tpu.matmul %9, %15, %cst_2 {dimension_numbers = #tpu.dot_dimension_numbers<[1], [0], [0], [1], [0, 0, 1, 1], [], []>, precision = #tpu.contract_precision<fp32>} : vector<1x8xf32>, vector<8x32xf32>, vector<1x32xf32> -> vector<1x32xf32>
    %17 = vector.broadcast %4 : f32 to vector<1x32xf32>
    %18 = arith.divf %16, %17 : vector<1x32xf32>
    %cst_3 = arith.constant 9.99999974E-6 : f32
    %19 = vector.broadcast %cst_3 : f32 to vector<1x32xf32>
    %20 = arith.addf %18, %19 : vector<1x32xf32>
    %21 = math.rsqrt %20 : vector<1x32xf32>
    %c0_4 = arith.constant 0 : index
    %c0_5 = arith.constant 0 : index
    %22 = vector.load %arg2[%c0_4, %c0_5] : memref<1x32xf32, #tpu.memory_space<vmem>>, vector<1x32xf32>
    %23 = arith.mulf %21, %22 : vector<1x32xf32>
    %24 = vector.broadcast %23 : vector<1x32xf32> to vector<8x32xf32>
    %25 = arith.mulf %14, %24 : vector<8x32xf32>
    %c0_6 = arith.constant 0 : index
    %c0_7 = arith.constant 0 : index
    %26 = vector.load %arg3[%c0_6, %c0_7] : memref<1x32xf32, #tpu.memory_space<vmem>>, vector<1x32xf32>
    %27 = vector.broadcast %26 : vector<1x32xf32> to vector<8x32xf32>
    %28 = arith.addf %25, %27 : vector<8x32xf32>
    %29 = tpu.iota {dimensions = array<i32: 0>} : vector<8x1xi32>
    %30 = vector.broadcast %3 : i32 to vector<8x1xi32>
    %31 = arith.cmpi slt, %29, %30 : vector<8x1xi32>
    %cst_8 = arith.constant 0.000000e+00 : f32
    %32 = vector.shape_cast %31 : vector<8x1xi1> to vector<8x1xi1>
    %33 = vector.broadcast %32 : vector<8x1xi1> to vector<8x32xi1>
    %34 = vector.broadcast %cst_8 : f32 to vector<8x32xf32>
    %35 = arith.select %33, %28, %34 : vector<8x32xi1>, vector<8x32xf32>
    %c0_9 = arith.constant 0 : index
    %c0_10 = arith.constant 0 : index
    %36 = vector.load %arg4[%c0_9, %c0_10] : memref<8x32xf32, #tpu.memory_space<vmem>>, vector<8x32xf32>
    tpu.vector_store %arg4[%c0_9, %c0_10], %35 {strides = array<i32>} : memref<8x32xf32, #tpu.memory_space<vmem>>, vector<8x32xf32>,
    %c0_11 = arith.constant 0 : index
    %c0_12 = arith.constant 0 : index
    %c0_13 = arith.constant 0 : index
    %37 = vector.load %arg5[%c0_11, %c0_12, %c0_13] : memref<1x1x32xf32, #tpu.memory_space<vmem>>, vector<1x1x32xf32>
    %38 = vector.shape_cast %37 : vector<1x1x32xf32> to vector<1x32xf32>
    %39 = vector.shape_cast %12 : vector<1x32xf32> to vector<1x1x32xf32>
    tpu.vector_store %arg5[%c0_11, %c0_12, %c0_13], %39 {strides = array<i32>} : memref<1x1x32xf32, #tpu.memory_space<vmem>>, vector<1x1x32xf32>,
    %c0_14 = arith.constant 0 : index
    %c0_15 = arith.constant 0 : index
    %c0_16 = arith.constant 0 : index
    %40 = vector.load %arg6[%c0_14, %c0_15, %c0_16] : memref<1x1x32xf32, #tpu.memory_space<vmem>>, vector<1x1x32xf32>
    %41 = vector.shape_cast %40 : vector<1x1x32xf32> to vector<1x32xf32>
    %42 = vector.shape_cast %18 : vector<1x32xf32> to vector<1x1x32xf32>
    tpu.vector_store %arg6[%c0_14, %c0_15, %c0_16], %42 {strides = array<i32>} : memref<1x1x32xf32, #tpu.memory_space<vmem>>, vector<1x1x32xf32>,
    return
  }
  func.func @transform_0(%arg0: i32) -> (i32, i32) {
    %c0_i32 = arith.constant 0 : i32
    %c0_i32_0 = arith.constant 0 : i32
    return %arg0, %c0_i32 : i32, i32
  }
  func.func @transform_1(%arg0: i32) -> (i32, i32) {
    %c0_i32 = arith.constant 0 : i32
    %c0_i32_0 = arith.constant 0 : i32
    %c0_i32_1 = arith.constant 0 : i32
    return %c0_i32, %c0_i32_0 : i32, i32
  }
  func.func @transform_2(%arg0: i32) -> (i32, i32) {
    %c0_i32 = arith.constant 0 : i32
    %c0_i32_0 = arith.constant 0 : i32
    %c0_i32_1 = arith.constant 0 : i32
    return %c0_i32, %c0_i32_0 : i32, i32
  }
  func.func @transform_3(%arg0: i32) -> (i32, i32) {
    %c0_i32 = arith.constant 0 : i32
    %c0_i32_0 = arith.constant 0 : i32
    return %arg0, %c0_i32 : i32, i32
  }
  func.func @transform_4(%arg0: i32) -> (i32, i32, i32) {
    %c0_i32 = arith.constant 0 : i32
    %c0_i32_0 = arith.constant 0 : i32
    %c0_i32_1 = arith.constant 0 : i32
    return %arg0, %c0_i32, %c0_i32_0 : i32, i32, i32
  }
  func.func @transform_5(%arg0: i32) -> (i32, i32, i32) {
    %c0_i32 = arith.constant 0 : i32
    %c0_i32_0 = arith.constant 0 : i32
    %c0_i32_1 = arith.constant 0 : i32
    return %arg0, %c0_i32, %c0_i32_0 : i32, i32, i32
  }
}

</mosaic_0001>

<llo_original>
// kernel: tpu_custom_call.1
$region0: #{tpu_custom_call.1}
  #allocation0 [shape = 'u32[]', space=smem, size = 0x4, offset = 0x4, fixed_abs, tag = 'smem constant byte address 0x4 - core index']
  #allocation1 [shape = 'u32[144,128]{1,0:T(1,128)}', space=vmem, size = 0x12000, scoped, tag = 'internal scratch']
  %s0 = inlined_call_operand.hbm [shape: f32[32,32], index: 0, kind: input, shape index: {}]
  %s1 = inlined_call_operand.vmem [shape: f32[1,32], index: 1, kind: input, shape index: {}]
  %s2 = inlined_call_operand.vmem [shape: f32[1,32], index: 2, kind: input, shape index: {}]
  %s3 = inlined_call_operand.hbm [shape: f32[32,32], index: 3, kind: output, shape index: {0}]
  %s4 = inlined_call_operand.hbm [shape: f32[4,1,32], index: 4, kind: output, shape index: {1}]
  %s5 = inlined_call_operand.hbm [shape: f32[4,1,32], index: 5, kind: output, shape index: {2}]
  %6 = xla_tuple %s3, %s4, %s5
  %s7 = sld [smem:[#allocation0]]
  $region65: #{tpu_custom_call.1} parent=0
    _
  %s9 = ssub.s32 1, %s7
  %s10 = scalar_select 0, %s9, %s7
  $region1: #{tpu_custom_call.1} parent=0
    #allocation2 [shape = 'u8[8192]{0}', space=vmem, size = 0x2000, scoped, tag = 'input window, operand 0']
    #allocation3 [shape = 's32[2]{0}', space=sflag, size = 0x8, scoped, tag = 'scoped memory for tpu_custom_call.1']
    #allocation4 [shape = 's32[2]{0}', space=sflag, size = 0x8, scoped, tag = 'scoped memory for tpu_custom_call.1']
    #allocation5 [shape = 'u8[8192]{0}', space=vmem, size = 0x2000, scoped, tag = 'output window, operand 0']
    #allocation6 [shape = 'u8[1024]{0}', space=vmem, size = 0x400, scoped, tag = 'output window, operand 1']
    #allocation7 [shape = 's32[2]{0}', space=sflag, size = 0x8, scoped, tag = 'scoped memory for tpu_custom_call.1']
    #allocation8 [shape = 'u8[1024]{0}', space=vmem, size = 0x400, scoped, tag = 'output window, operand 2']
    %11 = vsyncpa [#allocation3], 0
    %s12 = scalar_lea.sflag [#allocation3], 1
    %13 = vsyncpa %s12, 0
    %14 = vsyncpa [#allocation4], 0
    %s15 = scalar_lea.sflag [#allocation4], 1
    %16 = vsyncpa %s15, 0
    %17 = vsyncpa [#allocation7], 0
    %s18 = scalar_lea.sflag [#allocation7], 1
    %19 = vsyncpa %s18, 0
    loop: start=0, step=1, limit=6
    $region2: #{tpu_custom_call.1} parent=1 // loop_pre_header
      _
    $region3: #{tpu_custom_call.1} parent=1 // loop_header
      %s21 = sphi 0, %s25
      %p22 = scmp.ge.s32.totalorder %s21, 6
      %s31 = sphi 0, %s33
      %s34 = sphi 0, %s31
      %s35 = sphi 0, %s34
      %s51 = sphi 0, %s35
      %s55 = sphi 0, %s55
      %s57 = sphi 0, %s55
      %s58 = sphi 0, %s57
      %s72 = sphi 0, %s58
      %s76 = sphi 0, %s76
      %s78 = sphi 0, %s76
      %s79 = sphi 0, %s78
      %s93 = sphi 0, %s79
      %s99 = sphi 0, %s101
      %s102 = sphi 0, %s99
      %s103 = sphi 0, %s102
      %s119 = sphi 0, %s103
      %s125 = sphi 0, %s127
      %s128 = sphi 0, %s125
      %s129 = sphi 0, %s128
      %s145 = sphi 0, %s129
      %s151 = sphi 0, %s153
      %s154 = sphi 0, %s151
      %s155 = sphi 0, %s154
      %s171 = sphi 0, %s155
    $region4: #{tpu_custom_call.1} parent=1 // loop_header_branch
      %24 = sbr.rel (%p22) target = $region8
    $region5: #{tpu_custom_call.1} parent=1 // loop_body
      %s26 = ssub.s32 %s21, 1
      %s27 = ssub.s32 %s21, 2
      %s28 = sadd.s32 %s21, 1
      %s29 = ssub.s32 %s21, %s28
      %p30 = scmp.eq.s32.totalorder %s29, 0
      %s32 = sadd.s32 %s31, 1
      %s33 = scalar_select %p30, %s31, %s32
      %p36 = pneg %p30
      %p37 = scmp.eq.s32.totalorder %s21, 3
      %p38 = por %p36, %p37
      %p39 = scmp.ne.s32.totalorder %s31, %s34
      %p40 = scmp.eq.s32.totalorder %s21, 0
      %p41 = por %p39, %p40
      %p42 = scmp.ne.s32.totalorder %s31, %s34
      %p43 = scmp.eq.s32.totalorder %s26, 3
      %p44 = por %p42, %p43
      %p45 = scmp.ne.s32.totalorder %s34, %s35
      %p46 = scmp.eq.s32.totalorder %s26, 0
      %p47 = por %p45, %p46
      %p48 = scmp.ne.s32.totalorder %s34, %s35
      %p49 = scmp.eq.s32.totalorder %s27, 3
      %p50 = por %p48, %p49
      %p52 = scmp.ne.s32.totalorder %s35, %s51
      %p53 = scmp.eq.s32.totalorder %s27, 0
      %p54 = por %p52, %p53
      %s56 = sadd.s32 %s55, 1
      %p59 = scmp.eq.s32.totalorder %s21, 3
      %p60 = scmp.ne.s32.totalorder %s55, %s57
      %p61 = scmp.eq.s32.totalorder %s21, 0
      %p62 = por %p60, %p61
      %p63 = scmp.ne.s32.totalorder %s55, %s57
      %p64 = scmp.eq.s32.totalorder %s26, 3
      %p65 = por %p63, %p64
      %p66 = scmp.ne.s32.totalorder %s57, %s58
      %p67 = scmp.eq.s32.totalorder %s26, 0
      %p68 = por %p66, %p67
      %p69 = scmp.ne.s32.totalorder %s57, %s58
      %p70 = scmp.eq.s32.totalorder %s27, 3
      %p71 = por %p69, %p70
      %p73 = scmp.ne.s32.totalorder %s58, %s72
      %p74 = scmp.eq.s32.totalorder %s27, 0
      %p75 = por %p73, %p74
      %s77 = sadd.s32 %s76, 1
      %p80 = scmp.eq.s32.totalorder %s21, 3
      %p81 = scmp.ne.s32.totalorder %s76, %s78
      %p82 = scmp.eq.s32.totalorder %s21, 0
      %p83 = por %p81, %p82
      %p84 = scmp.ne.s32.totalorder %s76, %s78
      %p85 = scmp.eq.s32.totalorder %s26, 3
      %p86 = por %p84, %p85
      %p87 = scmp.ne.s32.totalorder %s78, %s79
      %p88 = scmp.eq.s32.totalorder %s26, 0
      %p89 = por %p87, %p88
      %p90 = scmp.ne.s32.totalorder %s78, %s79
      %p91 = scmp.eq.s32.totalorder %s27, 3
      %p92 = por %p90, %p91
      %p94 = scmp.ne.s32.totalorder %s79, %s93
      %p95 = scmp.eq.s32.totalorder %s27, 0
      %p96 = por %p94, %p95
      %s97 = ssub.s32 %s21, %s28
      %p98 = scmp.eq.s32.totalorder %s97, 0
      %s100 = sadd.s32 %s99, 1
      %s101 = scalar_select %p98, %s99, %s100
      %p104 = pneg %p98
      %p105 = scmp.eq.s32.totalorder %s21, 3
      %p106 = por %p104, %p105
      %p107 = scmp.ne.s32.totalorder %s99, %s102
      %p108 = scmp.eq.s32.totalorder %s21, 0
      %p109 = por %p107, %p108
      %p110 = scmp.ne.s32.totalorder %s99, %s102
      %p111 = scmp.eq.s32.totalorder %s26, 3
      %p112 = por %p110, %p111
      %p113 = scmp.ne.s32.totalorder %s102, %s103
      %p114 = scmp.eq.s32.totalorder %s26, 0
      %p115 = por %p113, %p114
      %p116 = scmp.ne.s32.totalorder %s102, %s103
      %p117 = scmp.eq.s32.totalorder %s27, 3
      %p118 = por %p116, %p117
      %p120 = scmp.ne.s32.totalorder %s103, %s119
      %p121 = scmp.eq.s32.totalorder %s27, 0
      %p122 = por %p120, %p121
      %s123 = ssub.s32 %s21, %s28
      %p124 = scmp.eq.s32.totalorder %s123, 0
      %s126 = sadd.s32 %s125, 1
      %s127 = scalar_select %p124, %s125, %s126
      %p130 = pneg %p124
      %p131 = scmp.eq.s32.totalorder %s21, 3
      %p132 = por %p130, %p131
      %p133 = scmp.ne.s32.totalorder %s125, %s128
      %p134 = scmp.eq.s32.totalorder %s21, 0
      %p135 = por %p133, %p134
      %p136 = scmp.ne.s32.totalorder %s125, %s128
      %p137 = scmp.eq.s32.totalorder %s26, 3
      %p138 = por %p136, %p137
      %p139 = scmp.ne.s32.totalorder %s128, %s129
      %p140 = scmp.eq.s32.totalorder %s26, 0
      %p141 = por %p139, %p140
      %p142 = scmp.ne.s32.totalorder %s128, %s129
      %p143 = scmp.eq.s32.totalorder %s27, 3
      %p144 = por %p142, %p143
      %p146 = scmp.ne.s32.totalorder %s129, %s145
      %p147 = scmp.eq.s32.totalorder %s27, 0
      %p148 = por %p146, %p147
      %s149 = ssub.s32 %s21, %s28
      %p150 = scmp.eq.s32.totalorder %s149, 0
      %s152 = sadd.s32 %s151, 1
      %s153 = scalar_select %p150, %s151, %s152
      %p156 = pneg %p150
      %p157 = scmp.eq.s32.totalorder %s21, 3
      %p158 = por %p156, %p157
      %p159 = scmp.ne.s32.totalorder %s151, %s154
      %p160 = scmp.eq.s32.totalorder %s21, 0
      %p161 = por %p159, %p160
      %p162 = scmp.ne.s32.totalorder %s151, %s154
      %p163 = scmp.eq.s32.totalorder %s26, 3
      %p164 = por %p162, %p163
      %p165 = scmp.ne.s32.totalorder %s154, %s155
      %p166 = scmp.eq.s32.totalorder %s26, 0
      %p167 = por %p165, %p166
      %p168 = scmp.ne.s32.totalorder %s154, %s155
      %p169 = scmp.eq.s32.totalorder %s27, 3
      %p170 = por %p168, %p169
      %p172 = scmp.ne.s32.totalorder %s155, %s171
      %p173 = scmp.eq.s32.totalorder %s27, 0
      %p174 = por %p172, %p173
      %p175 = scmp.le.s32.totalorder 1, %s21
      %p176 = scmp.lt.s32.totalorder %s21, 5
      %p177 = pnand %p175, %p176
      %p178 = pneg %p177
      // Predicated region
      $region9: #{tpu_custom_call.1} parent=5 // pred_check
        _
      $region10: #{tpu_custom_call.1} parent=5 // pred_check_branch
        %180 = sbr.rel (%p177) target = $region12
      $region11: #{tpu_custom_call.1} parent=5 // pred_region
        %s181 = ssub.s32 %s21, 1
        // Predicated region
        $region13: #{tpu_custom_call.1} parent=11 // pred_check
          %p182 = pneg %p68
        $region14: #{tpu_custom_call.1} parent=11 // pred_check_branch
          %184 = sbr.rel (%p182) target = $region16
        $region15: #{tpu_custom_call.1} parent=11 // pred_region
          _
        $region16: #{tpu_custom_call.1} parent=11 // pred_fallthru
          _
        // Predicated region
        $region17: #{tpu_custom_call.1} parent=11 // pred_check
          %p185 = pneg %p89
        $region18: #{tpu_custom_call.1} parent=11 // pred_check_branch
          %187 = sbr.rel (%p185) target = $region20
        $region19: #{tpu_custom_call.1} parent=11 // pred_region
          _
        $region20: #{tpu_custom_call.1} parent=11 // pred_fallthru
          _
      $region12: #{tpu_custom_call.1} parent=5 // pred_fallthru
        _
      %p188 = scmp.lt.s32.totalorder %s21, 4
      // Predicated region
      $region21: #{tpu_custom_call.1} parent=5 // pred_check
        %p189 = pneg %p188
      $region22: #{tpu_custom_call.1} parent=5 // pred_check_branch
        %191 = sbr.rel (%p189) target = $region24
      $region23: #{tpu_custom_call.1} parent=5 // pred_region
        // Predicated region
        $region25: #{tpu_custom_call.1} parent=23 // pred_check
          %p192 = pneg %p41
        $region26: #{tpu_custom_call.1} parent=23 // pred_check_branch
          %194 = sbr.rel (%p192) target = $region28
        $region27: #{tpu_custom_call.1} parent=23 // pred_region
          %s195 = sand.u32 %s31, 1
          %s196 = scalar_lea.sflag [#allocation3], %s195
          %s197 = sand.u32 %s31, 1
          %s198 = smul.addr %s197, 8
          %s199 = scalar_lea.vmem [#allocation2], %s198
          %s201 = ssub.s32 128, 128
          %202 = vsyncadd %s196, %s201
          %s203 = smul.addr %s21, 128
          %s204 = scalar_lea.hbm %s0, %s203
          %s206 = sshll.u32 %s199, 4
          %s207 = int_to_ptr.vmem [resolvable:$true] %s206
          %209 = dma.hbm_to_vmem [thread:$0]  %s204, 128, %s207, %s196
        $region28: #{tpu_custom_call.1} parent=23 // pred_fallthru
          _
      $region24: #{tpu_custom_call.1} parent=5 // pred_fallthru
        _
      %p210 = scmp.le.s32.totalorder 1, %s21
      %p211 = scmp.lt.s32.totalorder %s21, 5
      %p212 = pnand %p210, %p211
      %p213 = pneg %p212
      // Predicated region
      $region29: #{tpu_custom_call.1} parent=5 // pred_check
        _
      $region30: #{tpu_custom_call.1} parent=5 // pred_check_branch
        %215 = sbr.rel (%p212) target = $region32
      $region31: #{tpu_custom_call.1} parent=5 // pred_region
        %s216 = ssub.s32 %s21, 1
        %s217 = sand.u32 %s34, 1
        %s218 = scalar_lea.sflag [#allocation3], %s217
        %s219 = sand.u32 %s34, 1
        %s220 = smul.addr %s219, 8
        %s221 = scalar_lea.vmem [#allocation2], %s220
        // Predicated region
        $region33: #{tpu_custom_call.1} parent=31 // pred_check
          %p222 = pneg %p47
        $region34: #{tpu_custom_call.1} parent=31 // pred_check_branch
          %224 = sbr.rel (%p222) target = $region36
        $region35: #{tpu_custom_call.1} parent=31 // pred_region
          %225 = dma.done %s218, 128
        $region36: #{tpu_custom_call.1} parent=31 // pred_fallthru
          _
        %s226 = sand.u32 %s34, 1
        %s227 = scalar_lea.sflag [#allocation3], %s226
        %s228 = sand.u32 %s34, 1
        %s229 = smul.addr %s228, 8
        %s230 = scalar_lea.vmem [#allocation2], %s229
        %p231 = pneg %p47
        %p232 = pneg %p44
        %p233 = pneg %p68
        %p234 = pneg %p65
        %p235 = pneg %p89
        %p236 = pneg %p86
        %p237 = pneg %p115
        %p238 = pneg %p112
        %s239 = sand.u32 %s102, 1
        %s240 = scalar_lea.sflag [#allocation4], %s239
        %s241 = sand.u32 %s102, 1
        %s242 = smul.addr %s241, 8
        %s243 = scalar_lea.vmem [#allocation5], %s242
        %p244 = pneg %p141
        %p245 = pneg %p138
        %s246 = sand.u32 %s26, 1
        %s247 = scalar_lea.sflag [#allocation7], %s246
        %s248 = sand.u32 %s128, 1
        %s249 = scalar_lea.vmem [#allocation6], %s248
        %p250 = pneg %p167
        %p251 = pneg %p164
        %s252 = sand.u32 %s26, 1
        %s253 = scalar_lea.sflag [#allocation7], %s252
        %s254 = sand.u32 %s154, 1
        %s255 = scalar_lea.vmem [#allocation8], %s254
        %v256 = vld [vmem:[%s221] sm:$0xff]
        %s257 = smul.u32 %s26, 6
        %s258 = ssub.s32 22, %s257
        %p259 = scmp.lt.s32.totalorder %s258, 6
        %s260 = scalar_select %p259, %s258, 6
        %s261 = scvt.s32.f32 %s260
        %v262 = vlaneseq
        %v263 = vand.u32 %v262, 127
        %v264 = vstv %s260
        %vm265 = vcmp.lt.s32.totalorder %v263, %v264
        %v266 = vsel %vm265, 1, 0
        %v267 = vcvt.s32.f32 %v266
        %vm268 = vcmask 64512
        %v270 = vsel %vm268, %v267, 0
        %272 = vmatprep.subr.mxu0 0.0
        %273 = vmatpush1.msra.mxu0 0.0
        %274 = vmatprep.subr.mxu0 0.0
        %275 = vmatpush1.msra.mxu0 0.0
        %276 = vmatprep.subr.mxu0 0.0
        %277 = vmatpush1.msra.mxu0 0.0
        %278 = vmatprep.subr.mxu0 0.0
        %279 = vmatpush1.msra.mxu0 0.0
        %280 = vmatprep.subr.mxu0 0.0
        %281 = vmatpush1.msra.mxu0 0.0
        %282 = vmatprep.subr.mxu0 0.0
        %283 = vmatpush1.msra.mxu0 0.0
        %284 = vmatprep.subr.mxu0 0.0
        %285 = vmatpush1.msra.mxu0 0.0
        %286 = vmatprep.subr.mxu0 0.0
        %287 = vmatpush1.msra.mxu0 0.0
        %288 = vmatprep.subr.mxu0 0.0
        %289 = vmatpush1.msra.mxu0 0.0
        %290 = vmatprep.subr.mxu0 0.0
        %291 = vmatpush1.msra.mxu0 0.0
        %292 = vmatprep.subr.mxu0 0.0
        %293 = vmatpush1.msra.mxu0 0.0
        %294 = vmatprep.subr.mxu0 0.0
        %295 = vmatpush1.msra.mxu0 0.0
        %296 = vmatprep.subr.mxu0 0.0
        %297 = vmatpush1.msra.mxu0 0.0
        %298 = vmatprep.subr.mxu0 0.0
        %299 = vmatpush1.msra.mxu0 0.0
        %300 = vmatprep.subr.mxu0 0.0
        %301 = vmatpush1.msra.mxu0 0.0
        %302 = vmatprep.subr.mxu0 0.0
        %v303 = vand.u32 %v256, 4294901760
        %304 = vmatpush1.msra.mxu0 %v303
        %305 = vmatprep.subr.mxu0 0.0
        %306 = vmatpush2.msra.mxu0 0.0
        %307 = vmatprep.subr.mxu0 0.0
        %308 = vmatpush2.msra.mxu0 0.0
        %309 = vmatprep.subr.mxu0 0.0
        %310 = vmatpush2.msra.mxu0 0.0
        %311 = vmatprep.subr.mxu0 0.0
        %312 = vmatpush2.msra.mxu0 0.0
        %313 = vmatprep.subr.mxu0 0.0
        %314 = vmatpush2.msra.mxu0 0.0
        %315 = vmatprep.subr.mxu0 0.0
        %316 = vmatpush2.msra.mxu0 0.0
        %317 = vmatprep.subr.mxu0 0.0
        %318 = vmatpush2.msra.mxu0 0.0
        %319 = vmatprep.subr.mxu0 0.0
        %320 = vmatpush2.msra.mxu0 0.0
        %321 = vmatprep.subr.mxu0 0.0
        %322 = vmatpush2.msra.mxu0 0.0
        %323 = vmatprep.subr.mxu0 0.0
        %324 = vmatpush2.msra.mxu0 0.0
        %325 = vmatprep.subr.mxu0 0.0
        %326 = vmatpush2.msra.mxu0 0.0
        %327 = vmatprep.subr.mxu0 0.0
        %328 = vmatpush2.msra.mxu0 0.0
        %329 = vmatprep.subr.mxu0 0.0
        %330 = vmatpush2.msra.mxu0 0.0
        %331 = vmatprep.subr.mxu0 0.0
        %332 = vmatpush2.msra.mxu0 0.0
        %333 = vmatprep.subr.mxu0 0.0
        %334 = vmatpush2.msra.mxu0 0.0
        %335 = vmatprep.subr.mxu0 0.0
        %336 = vmatpush2.msra.mxu0 0.0
        %337 = vmatprep.mubr.f32.mxu0 0.0
        %v338 = vand.u32 %v270, 4294901760
        %v339 = vsub.f32 %v270, %v338
        %v340 = vand.u32 %v339, 4294901760
        %v341 = vsub.f32 %v339, %v340
        %v342 = vand.u32 %v341, 4294901760
        %343 = vmatmul.mubr.f32.gmra.mxu0 %v342
        %v344 = vpop.f32.mrf.mxu0
        %v345 = vadd.f32 0.0, %v344
        %v346 = vpop.f32.mrf.mxu0
        %347 = vdwg.mxu0
        %348 = vmatprep.subr.mxu0 0.0
        %349 = vmatpush1.msra.mxu0 0.0
        %350 = vmatprep.subr.mxu0 0.0
        %351 = vmatpush1.msra.mxu0 0.0
        %352 = vmatprep.subr.mxu0 0.0
        %353 = vmatpush1.msra.mxu0 0.0
        %354 = vmatprep.subr.mxu0 0.0
        %355 = vmatpush1.msra.mxu0 0.0
        %356 = vmatprep.subr.mxu0 0.0
        %357 = vmatpush1.msra.mxu0 0.0
        %358 = vmatprep.subr.mxu0 0.0
        %359 = vmatpush1.msra.mxu0 0.0
        %360 = vmatprep.subr.mxu0 0.0
        %361 = vmatpush1.msra.mxu0 0.0
        %362 = vmatprep.subr.mxu0 0.0
        %363 = vmatpush1.msra.mxu0 0.0
        %364 = vmatprep.subr.mxu0 0.0
        %365 = vmatpush1.msra.mxu0 0.0
        %366 = vmatprep.subr.mxu0 0.0
        %367 = vmatpush1.msra.mxu0 0.0
        %368 = vmatprep.subr.mxu0 0.0
        %369 = vmatpush1.msra.mxu0 0.0
        %370 = vmatprep.subr.mxu0 0.0
        %371 = vmatpush1.msra.mxu0 0.0
        %372 = vmatprep.subr.mxu0 0.0
        %373 = vmatpush1.msra.mxu0 0.0
        %374 = vmatprep.subr.mxu0 0.0
        %375 = vmatpush1.msra.mxu0 0.0
        %376 = vmatprep.subr.mxu0 0.0
        %377 = vmatpush1.msra.mxu0 0.0
        %378 = vmatprep.subr.mxu0 0.0
        %v379 = vand.u32 %v256, 4294901760
        %v380 = vsub.f32 %v256, %v379
        %v381 = vand.u32 %v380, 4294901760
        %v382 = vsub.f32 %v380, %v381
        %v383 = vand.u32 %v382, 4294901760
        %384 = vmatpush1.msra.mxu0 %v383
        %385 = vmatprep.subr.mxu0 0.0
        %386 = vmatpush2.msra.mxu0 0.0
        %387 = vmatprep.subr.mxu0 0.0
        %388 = vmatpush2.msra.mxu0 0.0
        %389 = vmatprep.subr.mxu0 0.0
        %390 = vmatpush2.msra.mxu0 0.0
        %391 = vmatprep.subr.mxu0 0.0
        %392 = vmatpush2.msra.mxu0 0.0
        %393 = vmatprep.subr.mxu0 0.0
        %394 = vmatpush2.msra.mxu0 0.0
        %395 = vmatprep.subr.mxu0 0.0
        %396 = vmatpush2.msra.mxu0 0.0
        %397 = vmatprep.subr.mxu0 0.0
        %398 = vmatpush2.msra.mxu0 0.0
        %399 = vmatprep.subr.mxu0 0.0
        %400 = vmatpush2.msra.mxu0 0.0
        %401 = vmatprep.subr.mxu0 0.0
        %402 = vmatpush2.msra.mxu0 0.0
        %403 = vmatprep.subr.mxu0 0.0
        %404 = vmatpush2.msra.mxu0 0.0
        %405 = vmatprep.subr.mxu0 0.0
        %406 = vmatpush2.msra.mxu0 0.0
        %407 = vmatprep.subr.mxu0 0.0
        %408 = vmatpush2.msra.mxu0 0.0
        %409 = vmatprep.subr.mxu0 0.0
        %410 = vmatpush2.msra.mxu0 0.0
        %411 = vmatprep.subr.mxu0 0.0
        %412 = vmatpush2.msra.mxu0 0.0
        %413 = vmatprep.subr.mxu0 0.0
        %414 = vmatpush2.msra.mxu0 0.0
        %415 = vmatprep.subr.mxu0 0.0
        %416 = vmatpush2.msra.mxu0 0.0
        %417 = vmatprep.mubr.f32.mxu0 0.0
        %v418 = vand.u32 %v270, 4294901760
        %419 = vmatmul.mubr.f32.gmra.mxu0 %v418
        %v420 = vpop.f32.mrf.mxu0
        %v421 = vadd.f32 %v345, %v420
        %v422 = vpop.f32.mrf.mxu0
        %423 = vdwg.mxu0
        %424 = vmatprep.subr.mxu0 0.0
        %425 = vmatpush1.msra.mxu0 0.0
        %426 = vmatprep.subr.mxu0 0.0
        %427 = vmatpush1.msra.mxu0 0.0
        %428 = vmatprep.subr.mxu0 0.0
        %429 = vmatpush1.msra.mxu0 0.0
        %430 = vmatprep.subr.mxu0 0.0
        %431 = vmatpush1.msra.mxu0 0.0
        %432 = vmatprep.subr.mxu0 0.0
        %433 = vmatpush1.msra.mxu0 0.0
        %434 = vmatprep.subr.mxu0 0.0
        %435 = vmatpush1.msra.mxu0 0.0
        %436 = vmatprep.subr.mxu0 0.0
        %437 = vmatpush1.msra.mxu0 0.0
        %438 = vmatprep.subr.mxu0 0.0
        %439 = vmatpush1.msra.mxu0 0.0
        %440 = vmatprep.subr.mxu0 0.0
        %441 = vmatpush1.msra.mxu0 0.0
        %442 = vmatprep.subr.mxu0 0.0
        %443 = vmatpush1.msra.mxu0 0.0
        %444 = vmatprep.subr.mxu0 0.0
        %445 = vmatpush1.msra.mxu0 0.0
        %446 = vmatprep.subr.mxu0 0.0
        %447 = vmatpush1.msra.mxu0 0.0
        %448 = vmatprep.subr.mxu0 0.0
        %449 = vmatpush1.msra.mxu0 0.0
        %450 = vmatprep.subr.mxu0 0.0
        %451 = vmatpush1.msra.mxu0 0.0
        %452 = vmatprep.subr.mxu0 0.0
        %453 = vmatpush1.msra.mxu0 0.0
        %454 = vmatprep.subr.mxu0 0.0
        %v455 = vand.u32 %v256, 4294901760
        %v456 = vsub.f32 %v256, %v455
        %457 = vmatpush1.msra.mxu0 %v456
        %458 = vmatprep.subr.mxu0 0.0
        %459 = vmatpush2.msra.mxu0 0.0
        %460 = vmatprep.subr.mxu0 0.0
        %461 = vmatpush2.msra.mxu0 0.0
        %462 = vmatprep.subr.mxu0 0.0
        %463 = vmatpush2.msra.mxu0 0.0
        %464 = vmatprep.subr.mxu0 0.0
        %465 = vmatpush2.msra.mxu0 0.0
        %466 = vmatprep.subr.mxu0 0.0
        %467 = vmatpush2.msra.mxu0 0.0
        %468 = vmatprep.subr.mxu0 0.0
        %469 = vmatpush2.msra.mxu0 0.0
        %470 = vmatprep.subr.mxu0 0.0
        %471 = vmatpush2.msra.mxu0 0.0
        %472 = vmatprep.subr.mxu0 0.0
        %473 = vmatpush2.msra.mxu0 0.0
        %474 = vmatprep.subr.mxu0 0.0
        %475 = vmatpush2.msra.mxu0 0.0
        %476 = vmatprep.subr.mxu0 0.0
        %477 = vmatpush2.msra.mxu0 0.0
        %478 = vmatprep.subr.mxu0 0.0
        %479 = vmatpush2.msra.mxu0 0.0
        %480 = vmatprep.subr.mxu0 0.0
        %481 = vmatpush2.msra.mxu0 0.0
        %482 = vmatprep.subr.mxu0 0.0
        %483 = vmatpush2.msra.mxu0 0.0
        %484 = vmatprep.subr.mxu0 0.0
        %485 = vmatpush2.msra.mxu0 0.0
        %486 = vmatprep.subr.mxu0 0.0
        %487 = vmatpush2.msra.mxu0 0.0
        %488 = vmatprep.subr.mxu0 0.0
        %489 = vmatpush2.msra.mxu0 0.0
        %490 = vmatprep.mubr.f32.mxu0 0.0
        %v491 = vand.u32 %v270, 4294901760
        %v492 = vsub.f32 %v270, %v491
        %493 = vmatmul.mubr.f32.gmra.mxu0 %v492
        %v494 = vpop.f32.mrf.mxu0
        %v495 = vadd.f32 %v421, %v494
        %v496 = vpop.f32.mrf.mxu0
        %497 = vdwg.mxu0
        %498 = vmatprep.subr.mxu0 0.0
        %499 = vmatpush1.msra.mxu0 0.0
        %500 = vmatprep.subr.mxu0 0.0
        %501 = vmatpush1.msra.mxu0 0.0
        %502 = vmatprep.subr.mxu0 0.0
        %503 = vmatpush1.msra.mxu0 0.0
        %504 = vmatprep.subr.mxu0 0.0
        %505 = vmatpush1.msra.mxu0 0.0
        %506 = vmatprep.subr.mxu0 0.0
        %507 = vmatpush1.msra.mxu0 0.0
        %508 = vmatprep.subr.mxu0 0.0
        %509 = vmatpush1.msra.mxu0 0.0
        %510 = vmatprep.subr.mxu0 0.0
        %511 = vmatpush1.msra.mxu0 0.0
        %512 = vmatprep.subr.mxu0 0.0
        %513 = vmatpush1.msra.mxu0 0.0
        %514 = vmatprep.subr.mxu0 0.0
        %515 = vmatpush1.msra.mxu0 0.0
        %516 = vmatprep.subr.mxu0 0.0
        %517 = vmatpush1.msra.mxu0 0.0
        %518 = vmatprep.subr.mxu0 0.0
        %519 = vmatpush1.msra.mxu0 0.0
        %520 = vmatprep.subr.mxu0 0.0
        %521 = vmatpush1.msra.mxu0 0.0
        %522 = vmatprep.subr.mxu0 0.0
        %523 = vmatpush1.msra.mxu0 0.0
        %524 = vmatprep.subr.mxu0 0.0
        %525 = vmatpush1.msra.mxu0 0.0
        %526 = vmatprep.subr.mxu0 0.0
        %527 = vmatpush1.msra.mxu0 0.0
        %528 = vmatprep.subr.mxu0 0.0
        %v529 = vand.u32 %v256, 4294901760
        %530 = vmatpush1.msra.mxu0 %v529
        %531 = vmatprep.subr.mxu0 0.0
        %532 = vmatpush2.msra.mxu0 0.0
        %533 = vmatprep.subr.mxu0 0.0
        %534 = vmatpush2.msra.mxu0 0.0
        %535 = vmatprep.subr.mxu0 0.0
        %536 = vmatpush2.msra.mxu0 0.0
        %537 = vmatprep.subr.mxu0 0.0
        %538 = vmatpush2.msra.mxu0 0.0
        %539 = vmatprep.subr.mxu0 0.0
        %540 = vmatpush2.msra.mxu0 0.0
        %541 = vmatprep.subr.mxu0 0.0
        %542 = vmatpush2.msra.mxu0 0.0
        %543 = vmatprep.subr.mxu0 0.0
        %544 = vmatpush2.msra.mxu0 0.0
        %545 = vmatprep.subr.mxu0 0.0
        %546 = vmatpush2.msra.mxu0 0.0
        %547 = vmatprep.subr.mxu0 0.0
        %548 = vmatpush2.msra.mxu0 0.0
        %549 = vmatprep.subr.mxu0 0.0
        %550 = vmatpush2.msra.mxu0 0.0
        %551 = vmatprep.subr.mxu0 0.0
        %552 = vmatpush2.msra.mxu0 0.0
        %553 = vmatprep.subr.mxu0 0.0
        %554 = vmatpush2.msra.mxu0 0.0
        %555 = vmatprep.subr.mxu0 0.0
        %556 = vmatpush2.msra.mxu0 0.0
        %557 = vmatprep.subr.mxu0 0.0
        %558 = vmatpush2.msra.mxu0 0.0
        %559 = vmatprep.subr.mxu0 0.0
        %560 = vmatpush2.msra.mxu0 0.0
        %561 = vmatprep.subr.mxu0 0.0
        %562 = vmatpush2.msra.mxu0 0.0
        %563 = vmatprep.mubr.f32.mxu0 0.0
        %v564 = vand.u32 %v270, 4294901760
        %v565 = vsub.f32 %v270, %v564
        %v566 = vand.u32 %v565, 4294901760
        %567 = vmatmul.mubr.f32.gmra.mxu0 %v566
        %v568 = vpop.f32.mrf.mxu0
        %v569 = vadd.f32 %v495, %v568
        %v570 = vpop.f32.mrf.mxu0
        %571 = vdwg.mxu0
        %572 = vmatprep.subr.mxu0 0.0
        %573 = vmatpush1.msra.mxu0 0.0
        %574 = vmatprep.subr.mxu0 0.0
        %575 = vmatpush1.msra.mxu0 0.0
        %576 = vmatprep.subr.mxu0 0.0
        %577 = vmatpush1.msra.mxu0 0.0
        %578 = vmatprep.subr.mxu0 0.0
        %579 = vmatpush1.msra.mxu0 0.0
        %580 = vmatprep.subr.mxu0 0.0
        %581 = vmatpush1.msra.mxu0 0.0
        %582 = vmatprep.subr.mxu0 0.0
        %583 = vmatpush1.msra.mxu0 0.0
        %584 = vmatprep.subr.mxu0 0.0
        %585 = vmatpush1.msra.mxu0 0.0
        %586 = vmatprep.subr.mxu0 0.0
        %587 = vmatpush1.msra.mxu0 0.0
        %588 = vmatprep.subr.mxu0 0.0
        %589 = vmatpush1.msra.mxu0 0.0
        %590 = vmatprep.subr.mxu0 0.0
        %591 = vmatpush1.msra.mxu0 0.0
        %592 = vmatprep.subr.mxu0 0.0
        %593 = vmatpush1.msra.mxu0 0.0
        %594 = vmatprep.subr.mxu0 0.0
        %595 = vmatpush1.msra.mxu0 0.0
        %596 = vmatprep.subr.mxu0 0.0
        %597 = vmatpush1.msra.mxu0 0.0
        %598 = vmatprep.subr.mxu0 0.0
        %599 = vmatpush1.msra.mxu0 0.0
        %600 = vmatprep.subr.mxu0 0.0
        %601 = vmatpush1.msra.mxu0 0.0
        %602 = vmatprep.subr.mxu0 0.0
        %v603 = vand.u32 %v256, 4294901760
        %v604 = vsub.f32 %v256, %v603
        %v605 = vand.u32 %v604, 4294901760
        %606 = vmatpush1.msra.mxu0 %v605
        %607 = vmatprep.subr.mxu0 0.0
        %608 = vmatpush2.msra.mxu0 0.0
        %609 = vmatprep.subr.mxu0 0.0
        %610 = vmatpush2.msra.mxu0 0.0
        %611 = vmatprep.subr.mxu0 0.0
        %612 = vmatpush2.msra.mxu0 0.0
        %613 = vmatprep.subr.mxu0 0.0
        %614 = vmatpush2.msra.mxu0 0.0
        %615 = vmatprep.subr.mxu0 0.0
        %616 = vmatpush2.msra.mxu0 0.0
        %617 = vmatprep.subr.mxu0 0.0
        %618 = vmatpush2.msra.mxu0 0.0
        %619 = vmatprep.subr.mxu0 0.0
        %620 = vmatpush2.msra.mxu0 0.0
        %621 = vmatprep.subr.mxu0 0.0
        %622 = vmatpush2.msra.mxu0 0.0
        %623 = vmatprep.subr.mxu0 0.0
        %624 = vmatpush2.msra.mxu0 0.0
        %625 = vmatprep.subr.mxu0 0.0
        %626 = vmatpush2.msra.mxu0 0.0
        %627 = vmatprep.subr.mxu0 0.0
        %628 = vmatpush2.msra.mxu0 0.0
        %629 = vmatprep.subr.mxu0 0.0
        %630 = vmatpush2.msra.mxu0 0.0
        %631 = vmatprep.subr.mxu0 0.0
        %632 = vmatpush2.msra.mxu0 0.0
        %633 = vmatprep.subr.mxu0 0.0
        %634 = vmatpush2.msra.mxu0 0.0
        %635 = vmatprep.subr.mxu0 0.0
        %636 = vmatpush2.msra.mxu0 0.0
        %637 = vmatprep.subr.mxu0 0.0
        %638 = vmatpush2.msra.mxu0 0.0
        %639 = vmatprep.mubr.f32.mxu0 0.0
        %v640 = vand.u32 %v270, 4294901760
        %641 = vmatmul.mubr.f32.gmra.mxu0 %v640
        %v642 = vpop.f32.mrf.mxu0
        %v643 = vadd.f32 %v569, %v642
        %v644 = vpop.f32.mrf.mxu0
        %645 = vdwg.mxu0
        %646 = vmatprep.subr.mxu0 0.0
        %647 = vmatpush1.msra.mxu0 0.0
        %648 = vmatprep.subr.mxu0 0.0
        %649 = vmatpush1.msra.mxu0 0.0
        %650 = vmatprep.subr.mxu0 0.0
        %651 = vmatpush1.msra.mxu0 0.0
        %652 = vmatprep.subr.mxu0 0.0
        %653 = vmatpush1.msra.mxu0 0.0
        %654 = vmatprep.subr.mxu0 0.0
        %655 = vmatpush1.msra.mxu0 0.0
        %656 = vmatprep.subr.mxu0 0.0
        %657 = vmatpush1.msra.mxu0 0.0
        %658 = vmatprep.subr.mxu0 0.0
        %659 = vmatpush1.msra.mxu0 0.0
        %660 = vmatprep.subr.mxu0 0.0
        %661 = vmatpush1.msra.mxu0 0.0
        %662 = vmatprep.subr.mxu0 0.0
        %663 = vmatpush1.msra.mxu0 0.0
        %664 = vmatprep.subr.mxu0 0.0
        %665 = vmatpush1.msra.mxu0 0.0
        %666 = vmatprep.subr.mxu0 0.0
        %667 = vmatpush1.msra.mxu0 0.0
        %668 = vmatprep.subr.mxu0 0.0
        %669 = vmatpush1.msra.mxu0 0.0
        %670 = vmatprep.subr.mxu0 0.0
        %671 = vmatpush1.msra.mxu0 0.0
        %672 = vmatprep.subr.mxu0 0.0
        %673 = vmatpush1.msra.mxu0 0.0
        %674 = vmatprep.subr.mxu0 0.0
        %675 = vmatpush1.msra.mxu0 0.0
        %676 = vmatprep.subr.mxu0 0.0
        %v677 = vand.u32 %v256, 4294901760
        %678 = vmatpush1.msra.mxu0 %v677
        %679 = vmatprep.subr.mxu0 0.0
        %680 = vmatpush2.msra.mxu0 0.0
        %681 = vmatprep.subr.mxu0 0.0
        %682 = vmatpush2.msra.mxu0 0.0
        %683 = vmatprep.subr.mxu0 0.0
        %684 = vmatpush2.msra.mxu0 0.0
        %685 = vmatprep.subr.mxu0 0.0
        %686 = vmatpush2.msra.mxu0 0.0
        %687 = vmatprep.subr.mxu0 0.0
        %688 = vmatpush2.msra.mxu0 0.0
        %689 = vmatprep.subr.mxu0 0.0
        %690 = vmatpush2.msra.mxu0 0.0
        %691 = vmatprep.subr.mxu0 0.0
        %692 = vmatpush2.msra.mxu0 0.0
        %693 = vmatprep.subr.mxu0 0.0
        %694 = vmatpush2.msra.mxu0 0.0
        %695 = vmatprep.subr.mxu0 0.0
        %696 = vmatpush2.msra.mxu0 0.0
        %697 = vmatprep.subr.mxu0 0.0
        %698 = vmatpush2.msra.mxu0 0.0
        %699 = vmatprep.subr.mxu0 0.0
        %700 = vmatpush2.msra.mxu0 0.0
        %701 = vmatprep.subr.mxu0 0.0
        %702 = vmatpush2.msra.mxu0 0.0
        %703 = vmatprep.subr.mxu0 0.0
        %704 = vmatpush2.msra.mxu0 0.0
        %705 = vmatprep.subr.mxu0 0.0
        %706 = vmatpush2.msra.mxu0 0.0
        %707 = vmatprep.subr.mxu0 0.0
        %708 = vmatpush2.msra.mxu0 0.0
        %709 = vmatprep.subr.mxu0 0.0
        %710 = vmatpush2.msra.mxu0 0.0
        %711 = vmatprep.mubr.f32.mxu0 0.0
        %v712 = vand.u32 %v270, 4294901760
        %713 = vmatmul.mubr.f32.gmra.mxu0 %v712
        %v714 = vpop.f32.mrf.mxu0
        %v715 = vadd.f32 %v643, %v714
        %v716 = vpop.f32.mrf.mxu0
        %717 = vdwg.mxu0
        %v718 = vstv %s261
        %v719 = vrcp.pop %v718
        %v720 = vmul.f32 %v715, %v719
        %v721 = vlaneseq
        %v722 = vshrl.u32 %v721, 7
        %v723 = vsub.s32 0, %v722
        %v724 = vrot.slane %v720, %v723
        %v725 = vsub.f32 %v256, %v724
        %v726 = vmul.f32 %v725, %v725
        %727 = vmatprep.subr.mxu0 0.0
        %728 = vmatpush1.msra.mxu0 0.0
        %729 = vmatprep.subr.mxu0 0.0
        %730 = vmatpush1.msra.mxu0 0.0
        %731 = vmatprep.subr.mxu0 0.0
        %732 = vmatpush1.msra.mxu0 0.0
        %733 = vmatprep.subr.mxu0 0.0
        %734 = vmatpush1.msra.mxu0 0.0
        %735 = vmatprep.subr.mxu0 0.0
        %736 = vmatpush1.msra.mxu0 0.0
        %737 = vmatprep.subr.mxu0 0.0
        %738 = vmatpush1.msra.mxu0 0.0
        %739 = vmatprep.subr.mxu0 0.0
        %740 = vmatpush1.msra.mxu0 0.0
        %741 = vmatprep.subr.mxu0 0.0
        %742 = vmatpush1.msra.mxu0 0.0
        %743 = vmatprep.subr.mxu0 0.0
        %744 = vmatpush1.msra.mxu0 0.0
        %745 = vmatprep.subr.mxu0 0.0
        %746 = vmatpush1.msra.mxu0 0.0
        %747 = vmatprep.subr.mxu0 0.0
        %748 = vmatpush1.msra.mxu0 0.0
        %749 = vmatprep.subr.mxu0 0.0
        %750 = vmatpush1.msra.mxu0 0.0
        %751 = vmatprep.subr.mxu0 0.0
        %752 = vmatpush1.msra.mxu0 0.0
        %753 = vmatprep.subr.mxu0 0.0
        %754 = vmatpush1.msra.mxu0 0.0
        %755 = vmatprep.subr.mxu0 0.0
        %756 = vmatpush1.msra.mxu0 0.0
        %757 = vmatprep.subr.mxu0 0.0
        %v758 = vand.u32 %v726, 4294901760
        %759 = vmatpush1.msra.mxu0 %v758
        %760 = vmatprep.subr.mxu0 0.0
        %761 = vmatpush2.msra.mxu0 0.0
        %762 = vmatprep.subr.mxu0 0.0
        %763 = vmatpush2.msra.mxu0 0.0
        %764 = vmatprep.subr.mxu0 0.0
        %765 = vmatpush2.msra.mxu0 0.0
        %766 = vmatprep.subr.mxu0 0.0
        %767 = vmatpush2.msra.mxu0 0.0
        %768 = vmatprep.subr.mxu0 0.0
        %769 = vmatpush2.msra.mxu0 0.0
        %770 = vmatprep.subr.mxu0 0.0
        %771 = vmatpush2.msra.mxu0 0.0
        %772 = vmatprep.subr.mxu0 0.0
        %773 = vmatpush2.msra.mxu0 0.0
        %774 = vmatprep.subr.mxu0 0.0
        %775 = vmatpush2.msra.mxu0 0.0
        %776 = vmatprep.subr.mxu0 0.0
        %777 = vmatpush2.msra.mxu0 0.0
        %778 = vmatprep.subr.mxu0 0.0
        %779 = vmatpush2.msra.mxu0 0.0
        %780 = vmatprep.subr.mxu0 0.0
        %781 = vmatpush2.msra.mxu0 0.0
        %782 = vmatprep.subr.mxu0 0.0
        %783 = vmatpush2.msra.mxu0 0.0
        %784 = vmatprep.subr.mxu0 0.0
        %785 = vmatpush2.msra.mxu0 0.0
        %786 = vmatprep.subr.mxu0 0.0
        %787 = vmatpush2.msra.mxu0 0.0
        %788 = vmatprep.subr.mxu0 0.0
        %789 = vmatpush2.msra.mxu0 0.0
        %790 = vmatprep.subr.mxu0 0.0
        %791 = vmatpush2.msra.mxu0 0.0
        %792 = vmatprep.mubr.f32.mxu0 0.0
        %v793 = vand.u32 %v270, 4294901760
        %v794 = vsub.f32 %v270, %v793
        %v795 = vand.u32 %v794, 4294901760
        %v796 = vsub.f32 %v794, %v795
        %v797 = vand.u32 %v796, 4294901760
        %798 = vmatmul.mubr.f32.gmra.mxu0 %v797
        %v799 = vpop.f32.mrf.mxu0
        %v800 = vadd.f32 0.0, %v799
        %v801 = vpop.f32.mrf.mxu0
        %802 = vdwg.mxu0
        %803 = vmatprep.subr.mxu0 0.0
        %804 = vmatpush1.msra.mxu0 0.0
        %805 = vmatprep.subr.mxu0 0.0
        %806 = vmatpush1.msra.mxu0 0.0
        %807 = vmatprep.subr.mxu0 0.0
        %808 = vmatpush1.msra.mxu0 0.0
        %809 = vmatprep.subr.mxu0 0.0
        %810 = vmatpush1.msra.mxu0 0.0
        %811 = vmatprep.subr.mxu0 0.0
        %812 = vmatpush1.msra.mxu0 0.0
        %813 = vmatprep.subr.mxu0 0.0
        %814 = vmatpush1.msra.mxu0 0.0
        %815 = vmatprep.subr.mxu0 0.0
        %816 = vmatpush1.msra.mxu0 0.0
        %817 = vmatprep.subr.mxu0 0.0
        %818 = vmatpush1.msra.mxu0 0.0
        %819 = vmatprep.subr.mxu0 0.0
        %820 = vmatpush1.msra.mxu0 0.0
        %821 = vmatprep.subr.mxu0 0.0
        %822 = vmatpush1.msra.mxu0 0.0
        %823 = vmatprep.subr.mxu0 0.0
        %824 = vmatpush1.msra.mxu0 0.0
        %825 = vmatprep.subr.mxu0 0.0
        %826 = vmatpush1.msra.mxu0 0.0
        %827 = vmatprep.subr.mxu0 0.0
        %828 = vmatpush1.msra.mxu0 0.0
        %829 = vmatprep.subr.mxu0 0.0
        %830 = vmatpush1.msra.mxu0 0.0
        %831 = vmatprep.subr.mxu0 0.0
        %832 = vmatpush1.msra.mxu0 0.0
        %833 = vmatprep.subr.mxu0 0.0
        %v834 = vand.u32 %v726, 4294901760
        %v835 = vsub.f32 %v726, %v834
        %v836 = vand.u32 %v835, 4294901760
        %v837 = vsub.f32 %v835, %v836
        %v838 = vand.u32 %v837, 4294901760
        %839 = vmatpush1.msra.mxu0 %v838
        %840 = vmatprep.subr.mxu0 0.0
        %841 = vmatpush2.msra.mxu0 0.0
        %842 = vmatprep.subr.mxu0 0.0
        %843 = vmatpush2.msra.mxu0 0.0
        %844 = vmatprep.subr.mxu0 0.0
        %845 = vmatpush2.msra.mxu0 0.0
        %846 = vmatprep.subr.mxu0 0.0
        %847 = vmatpush2.msra.mxu0 0.0
        %848 = vmatprep.subr.mxu0 0.0
        %849 = vmatpush2.msra.mxu0 0.0
        %850 = vmatprep.subr.mxu0 0.0
        %851 = vmatpush2.msra.mxu0 0.0
        %852 = vmatprep.subr.mxu0 0.0
        %853 = vmatpush2.msra.mxu0 0.0
        %854 = vmatprep.subr.mxu0 0.0
        %855 = vmatpush2.msra.mxu0 0.0
        %856 = vmatprep.subr.mxu0 0.0
        %857 = vmatpush2.msra.mxu0 0.0
        %858 = vmatprep.subr.mxu0 0.0
        %859 = vmatpush2.msra.mxu0 0.0
        %860 = vmatprep.subr.mxu0 0.0
        %861 = vmatpush2.msra.mxu0 0.0
        %862 = vmatprep.subr.mxu0 0.0
        %863 = vmatpush2.msra.mxu0 0.0
        %864 = vmatprep.subr.mxu0 0.0
        %865 = vmatpush2.msra.mxu0 0.0
        %866 = vmatprep.subr.mxu0 0.0
        %867 = vmatpush2.msra.mxu0 0.0
        %868 = vmatprep.subr.mxu0 0.0
        %869 = vmatpush2.msra.mxu0 0.0
        %870 = vmatprep.subr.mxu0 0.0
        %871 = vmatpush2.msra.mxu0 0.0
        %872 = vmatprep.mubr.f32.mxu0 0.0
        %v873 = vand.u32 %v270, 4294901760
        %874 = vmatmul.mubr.f32.gmra.mxu0 %v873
        %v875 = vpop.f32.mrf.mxu0
        %v876 = vadd.f32 %v800, %v875
        %v877 = vpop.f32.mrf.mxu0
        %878 = vdwg.mxu0
        %879 = vmatprep.subr.mxu0 0.0
        %880 = vmatpush1.msra.mxu0 0.0
        %881 = vmatprep.subr.mxu0 0.0
        %882 = vmatpush1.msra.mxu0 0.0
        %883 = vmatprep.subr.mxu0 0.0
        %884 = vmatpush1.msra.mxu0 0.0
        %885 = vmatprep.subr.mxu0 0.0
        %886 = vmatpush1.msra.mxu0 0.0
        %887 = vmatprep.subr.mxu0 0.0
        %888 = vmatpush1.msra.mxu0 0.0
        %889 = vmatprep.subr.mxu0 0.0
        %890 = vmatpush1.msra.mxu0 0.0
        %891 = vmatprep.subr.mxu0 0.0
        %892 = vmatpush1.msra.mxu0 0.0
        %893 = vmatprep.subr.mxu0 0.0
        %894 = vmatpush1.msra.mxu0 0.0
        %895 = vmatprep.subr.mxu0 0.0
        %896 = vmatpush1.msra.mxu0 0.0
        %897 = vmatprep.subr.mxu0 0.0
        %898 = vmatpush1.msra.mxu0 0.0
        %899 = vmatprep.subr.mxu0 0.0
        %900 = vmatpush1.msra.mxu0 0.0
        %901 = vmatprep.subr.mxu0 0.0
        %902 = vmatpush1.msra.mxu0 0.0
        %903 = vmatprep.subr.mxu0 0.0
        %904 = vmatpush1.msra.mxu0 0.0
        %905 = vmatprep.subr.mxu0 0.0
        %906 = vmatpush1.msra.mxu0 0.0
        %907 = vmatprep.subr.mxu0 0.0
        %908 = vmatpush1.msra.mxu0 0.0
        %909 = vmatprep.subr.mxu0 0.0
        %v910 = vand.u32 %v726, 4294901760
        %v911 = vsub.f32 %v726, %v910
        %912 = vmatpush1.msra.mxu0 %v911
        %913 = vmatprep.subr.mxu0 0.0
        %914 = vmatpush2.msra.mxu0 0.0
        %915 = vmatprep.subr.mxu0 0.0
        %916 = vmatpush2.msra.mxu0 0.0
        %917 = vmatprep.subr.mxu0 0.0
        %918 = vmatpush2.msra.mxu0 0.0
        %919 = vmatprep.subr.mxu0 0.0
        %920 = vmatpush2.msra.mxu0 0.0
        %921 = vmatprep.subr.mxu0 0.0
        %922 = vmatpush2.msra.mxu0 0.0
        %923 = vmatprep.subr.mxu0 0.0
        %924 = vmatpush2.msra.mxu0 0.0
        %925 = vmatprep.subr.mxu0 0.0
        %926 = vmatpush2.msra.mxu0 0.0
        %927 = vmatprep.subr.mxu0 0.0
        %928 = vmatpush2.msra.mxu0 0.0
        %929 = vmatprep.subr.mxu0 0.0
        %930 = vmatpush2.msra.mxu0 0.0
        %931 = vmatprep.subr.mxu0 0.0
        %932 = vmatpush2.msra.mxu0 0.0
        %933 = vmatprep.subr.mxu0 0.0
        %934 = vmatpush2.msra.mxu0 0.0
        %935 = vmatprep.subr.mxu0 0.0
        %936 = vmatpush2.msra.mxu0 0.0
        %937 = vmatprep.subr.mxu0 0.0
        %938 = vmatpush2.msra.mxu0 0.0
        %939 = vmatprep.subr.mxu0 0.0
        %940 = vmatpush2.msra.mxu0 0.0
        %941 = vmatprep.subr.mxu0 0.0
        %942 = vmatpush2.msra.mxu0 0.0
        %943 = vmatprep.subr.mxu0 0.0
        %944 = vmatpush2.msra.mxu0 0.0
        %945 = vmatprep.mubr.f32.mxu0 0.0
        %v946 = vand.u32 %v270, 4294901760
        %v947 = vsub.f32 %v270, %v946
        %948 = vmatmul.mubr.f32.gmra.mxu0 %v947
        %v949 = vpop.f32.mrf.mxu0
        %v950 = vadd.f32 %v876, %v949
        %v951 = vpop.f32.mrf.mxu0
        %952 = vdwg.mxu0
        %953 = vmatprep.subr.mxu0 0.0
        %954 = vmatpush1.msra.mxu0 0.0
        %955 = vmatprep.subr.mxu0 0.0
        %956 = vmatpush1.msra.mxu0 0.0
        %957 = vmatprep.subr.mxu0 0.0
        %958 = vmatpush1.msra.mxu0 0.0
        %959 = vmatprep.subr.mxu0 0.0
        %960 = vmatpush1.msra.mxu0 0.0
        %961 = vmatprep.subr.mxu0 0.0
        %962 = vmatpush1.msra.mxu0 0.0
        %963 = vmatprep.subr.mxu0 0.0
        %964 = vmatpush1.msra.mxu0 0.0
        %965 = vmatprep.subr.mxu0 0.0
        %966 = vmatpush1.msra.mxu0 0.0
        %967 = vmatprep.subr.mxu0 0.0
        %968 = vmatpush1.msra.mxu0 0.0
        %969 = vmatprep.subr.mxu0 0.0
        %970 = vmatpush1.msra.mxu0 0.0
        %971 = vmatprep.subr.mxu0 0.0
        %972 = vmatpush1.msra.mxu0 0.0
        %973 = vmatprep.subr.mxu0 0.0
        %974 = vmatpush1.msra.mxu0 0.0
        %975 = vmatprep.subr.mxu0 0.0
        %976 = vmatpush1.msra.mxu0 0.0
        %977 = vmatprep.subr.mxu0 0.0
        %978 = vmatpush1.msra.mxu0 0.0
        %979 = vmatprep.subr.mxu0 0.0
        %980 = vmatpush1.msra.mxu0 0.0
        %981 = vmatprep.subr.mxu0 0.0
        %982 = vmatpush1.msra.mxu0 0.0
        %983 = vmatprep.subr.mxu0 0.0
        %v984 = vand.u32 %v726, 4294901760
        %985 = vmatpush1.msra.mxu0 %v984
        %986 = vmatprep.subr.mxu0 0.0
        %987 = vmatpush2.msra.mxu0 0.0
        %988 = vmatprep.subr.mxu0 0.0
        %989 = vmatpush2.msra.mxu0 0.0
        %990 = vmatprep.subr.mxu0 0.0
        %991 = vmatpush2.msra.mxu0 0.0
        %992 = vmatprep.subr.mxu0 0.0
        %993 = vmatpush2.msra.mxu0 0.0
        %994 = vmatprep.subr.mxu0 0.0
        %995 = vmatpush2.msra.mxu0 0.0
        %996 = vmatprep.subr.mxu0 0.0
        %997 = vmatpush2.msra.mxu0 0.0
        %998 = vmatprep.subr.mxu0 0.0
        %999 = vmatpush2.msra.mxu0 0.0
        %1000 = vmatprep.subr.mxu0 0.0
        %1001 = vmatpush2.msra.mxu0 0.0
        %1002 = vmatprep.subr.mxu0 0.0
        %1003 = vmatpush2.msra.mxu0 0.0
        %1004 = vmatprep.subr.mxu0 0.0
        %1005 = vmatpush2.msra.mxu0 0.0
        %1006 = vmatprep.subr.mxu0 0.0
        %1007 = vmatpush2.msra.mxu0 0.0
        %1008 = vmatprep.subr.mxu0 0.0
        %1009 = vmatpush2.msra.mxu0 0.0
        %1010 = vmatprep.subr.mxu0 0.0
        %1011 = vmatpush2.msra.mxu0 0.0
        %1012 = vmatprep.subr.mxu0 0.0
        %1013 = vmatpush2.msra.mxu0 0.0
        %1014 = vmatprep.subr.mxu0 0.0
        %1015 = vmatpush2.msra.mxu0 0.0
        %1016 = vmatprep.subr.mxu0 0.0
        %1017 = vmatpush2.msra.mxu0 0.0
        %1018 = vmatprep.mubr.f32.mxu0 0.0
        %v1019 = vand.u32 %v270, 4294901760
        %v1020 = vsub.f32 %v270, %v1019
        %v1021 = vand.u32 %v1020, 4294901760
        %1022 = vmatmul.mubr.f32.gmra.mxu0 %v1021
        %v1023 = vpop.f32.mrf.mxu0
        %v1024 = vadd.f32 %v950, %v1023
        %v1025 = vpop.f32.mrf.mxu0
        %1026 = vdwg.mxu0
        %1027 = vmatprep.subr.mxu0 0.0
        %1028 = vmatpush1.msra.mxu0 0.0
        %1029 = vmatprep.subr.mxu0 0.0
        %1030 = vmatpush1.msra.mxu0 0.0
        %1031 = vmatprep.subr.mxu0 0.0
        %1032 = vmatpush1.msra.mxu0 0.0
        %1033 = vmatprep.subr.mxu0 0.0
        %1034 = vmatpush1.msra.mxu0 0.0
        %1035 = vmatprep.subr.mxu0 0.0
        %1036 = vmatpush1.msra.mxu0 0.0
        %1037 = vmatprep.subr.mxu0 0.0
        %1038 = vmatpush1.msra.mxu0 0.0
        %1039 = vmatprep.subr.mxu0 0.0
        %1040 = vmatpush1.msra.mxu0 0.0
        %1041 = vmatprep.subr.mxu0 0.0
        %1042 = vmatpush1.msra.mxu0 0.0
        %1043 = vmatprep.subr.mxu0 0.0
        %1044 = vmatpush1.msra.mxu0 0.0
        %1045 = vmatprep.subr.mxu0 0.0
        %1046 = vmatpush1.msra.mxu0 0.0
        %1047 = vmatprep.subr.mxu0 0.0
        %1048 = vmatpush1.msra.mxu0 0.0
        %1049 = vmatprep.subr.mxu0 0.0
        %1050 = vmatpush1.msra.mxu0 0.0
        %1051 = vmatprep.subr.mxu0 0.0
        %1052 = vmatpush1.msra.mxu0 0.0
        %1053 = vmatprep.subr.mxu0 0.0
        %1054 = vmatpush1.msra.mxu0 0.0
        %1055 = vmatprep.subr.mxu0 0.0
        %1056 = vmatpush1.msra.mxu0 0.0
        %1057 = vmatprep.subr.mxu0 0.0
        %v1058 = vand.u32 %v726, 4294901760
        %v1059 = vsub.f32 %v726, %v1058
        %v1060 = vand.u32 %v1059, 4294901760
        %1061 = vmatpush1.msra.mxu0 %v1060
        %1062 = vmatprep.subr.mxu0 0.0
        %1063 = vmatpush2.msra.mxu0 0.0
        %1064 = vmatprep.subr.mxu0 0.0
        %1065 = vmatpush2.msra.mxu0 0.0
        %1066 = vmatprep.subr.mxu0 0.0
        %1067 = vmatpush2.msra.mxu0 0.0
        %1068 = vmatprep.subr.mxu0 0.0
        %1069 = vmatpush2.msra.mxu0 0.0
        %1070 = vmatprep.subr.mxu0 0.0
        %1071 = vmatpush2.msra.mxu0 0.0
        %1072 = vmatprep.subr.mxu0 0.0
        %1073 = vmatpush2.msra.mxu0 0.0
        %1074 = vmatprep.subr.mxu0 0.0
        %1075 = vmatpush2.msra.mxu0 0.0
        %1076 = vmatprep.subr.mxu0 0.0
        %1077 = vmatpush2.msra.mxu0 0.0
        %1078 = vmatprep.subr.mxu0 0.0
        %1079 = vmatpush2.msra.mxu0 0.0
        %1080 = vmatprep.subr.mxu0 0.0
        %1081 = vmatpush2.msra.mxu0 0.0
        %1082 = vmatprep.subr.mxu0 0.0
        %1083 = vmatpush2.msra.mxu0 0.0
        %1084 = vmatprep.subr.mxu0 0.0
        %1085 = vmatpush2.msra.mxu0 0.0
        %1086 = vmatprep.subr.mxu0 0.0
        %1087 = vmatpush2.msra.mxu0 0.0
        %1088 = vmatprep.subr.mxu0 0.0
        %1089 = vmatpush2.msra.mxu0 0.0
        %1090 = vmatprep.subr.mxu0 0.0
        %1091 = vmatpush2.msra.mxu0 0.0
        %1092 = vmatprep.subr.mxu0 0.0
        %1093 = vmatpush2.msra.mxu0 0.0
        %1094 = vmatprep.mubr.f32.mxu0 0.0
        %v1095 = vand.u32 %v270, 4294901760
        %1096 = vmatmul.mubr.f32.gmra.mxu0 %v1095
        %v1097 = vpop.f32.mrf.mxu0
        %v1098 = vadd.f32 %v1024, %v1097
        %v1099 = vpop.f32.mrf.mxu0
        %1100 = vdwg.mxu0
        %1101 = vmatprep.subr.mxu0 0.0
        %1102 = vmatpush1.msra.mxu0 0.0
        %1103 = vmatprep.subr.mxu0 0.0
        %1104 = vmatpush1.msra.mxu0 0.0
        %1105 = vmatprep.subr.mxu0 0.0
        %1106 = vmatpush1.msra.mxu0 0.0
        %1107 = vmatprep.subr.mxu0 0.0
        %1108 = vmatpush1.msra.mxu0 0.0
        %1109 = vmatprep.subr.mxu0 0.0
        %1110 = vmatpush1.msra.mxu0 0.0
        %1111 = vmatprep.subr.mxu0 0.0
        %1112 = vmatpush1.msra.mxu0 0.0
        %1113 = vmatprep.subr.mxu0 0.0
        %1114 = vmatpush1.msra.mxu0 0.0
        %1115 = vmatprep.subr.mxu0 0.0
        %1116 = vmatpush1.msra.mxu0 0.0
        %1117 = vmatprep.subr.mxu0 0.0
        %1118 = vmatpush1.msra.mxu0 0.0
        %1119 = vmatprep.subr.mxu0 0.0
        %1120 = vmatpush1.msra.mxu0 0.0
        %1121 = vmatprep.subr.mxu0 0.0
        %1122 = vmatpush1.msra.mxu0 0.0
        %1123 = vmatprep.subr.mxu0 0.0
        %1124 = vmatpush1.msra.mxu0 0.0
        %1125 = vmatprep.subr.mxu0 0.0
        %1126 = vmatpush1.msra.mxu0 0.0
        %1127 = vmatprep.subr.mxu0 0.0
        %1128 = vmatpush1.msra.mxu0 0.0
        %1129 = vmatprep.subr.mxu0 0.0
        %1130 = vmatpush1.msra.mxu0 0.0
        %1131 = vmatprep.subr.mxu0 0.0
        %v1132 = vand.u32 %v726, 4294901760
        %1133 = vmatpush1.msra.mxu0 %v1132
        %1134 = vmatprep.subr.mxu0 0.0
        %1135 = vmatpush2.msra.mxu0 0.0
        %1136 = vmatprep.subr.mxu0 0.0
        %1137 = vmatpush2.msra.mxu0 0.0
        %1138 = vmatprep.subr.mxu0 0.0
        %1139 = vmatpush2.msra.mxu0 0.0
        %1140 = vmatprep.subr.mxu0 0.0
        %1141 = vmatpush2.msra.mxu0 0.0
        %1142 = vmatprep.subr.mxu0 0.0
        %1143 = vmatpush2.msra.mxu0 0.0
        %1144 = vmatprep.subr.mxu0 0.0
        %1145 = vmatpush2.msra.mxu0 0.0
        %1146 = vmatprep.subr.mxu0 0.0
        %1147 = vmatpush2.msra.mxu0 0.0
        %1148 = vmatprep.subr.mxu0 0.0
        %1149 = vmatpush2.msra.mxu0 0.0
        %1150 = vmatprep.subr.mxu0 0.0
        %1151 = vmatpush2.msra.mxu0 0.0
        %1152 = vmatprep.subr.mxu0 0.0
        %1153 = vmatpush2.msra.mxu0 0.0
        %1154 = vmatprep.subr.mxu0 0.0
        %1155 = vmatpush2.msra.mxu0 0.0
        %1156 = vmatprep.subr.mxu0 0.0
        %1157 = vmatpush2.msra.mxu0 0.0
        %1158 = vmatprep.subr.mxu0 0.0
        %1159 = vmatpush2.msra.mxu0 0.0
        %1160 = vmatprep.subr.mxu0 0.0
        %1161 = vmatpush2.msra.mxu0 0.0
        %1162 = vmatprep.subr.mxu0 0.0
        %1163 = vmatpush2.msra.mxu0 0.0
        %1164 = vmatprep.subr.mxu0 0.0
        %1165 = vmatpush2.msra.mxu0 0.0
        %1166 = vmatprep.mubr.f32.mxu0 0.0
        %v1167 = vand.u32 %v270, 4294901760
        %1168 = vmatmul.mubr.f32.gmra.mxu0 %v1167
        %v1169 = vpop.f32.mrf.mxu0
        %v1170 = vadd.f32 %v1098, %v1169
        %v1171 = vpop.f32.mrf.mxu0
        %1172 = vdwg.mxu0
        %v1173 = vmul.f32 %v1170, %v719
        %v1174 = vadd.f32 %v1173, 1e-05
        %v1175 = vrsqrt.pop %v1174
        %v1176 = vld [vmem:[%s1] sm:$0x1]
        %v1177 = vmul.f32 %v1175, %v1176
        %v1178 = vlaneseq
        %v1179 = vshrl.u32 %v1178, 7
        %v1180 = vsub.s32 0, %v1179
        %v1181 = vrot.slane %v1177, %v1180
        %v1182 = vmul.f32 %v725, %v1181
        %v1183 = vld [vmem:[%s2] sm:$0x1]
        %v1185 = vlaneseq
        %v1186 = vshrl.u32 %v1185, 7
        %v1187 = vsub.s32 0, %v1186
        %v1188 = vrot.slane %v1183, %v1187
        %v1190 = vadd.f32 %v1182, %v1188
        %v1191 = vlaneseq
        %v1192 = vshrl.u32 %v1191, 7
        %vm1193 = vcmp.lt.s32.totalorder %v1192, %v264
        %v1194 = vsel %vm1193, 1, 0
        %vm1195 = vcmp.eq.s32.totalorder %v1194, 1
        %v1196 = vsel %vm1195, %v1190, 0.0
        %vm1197 = vcmask 261120
        %1198 = vst.msk [vmem:[%s243] sm:$0xff] %vm1197, %v1196
        %vm1199 = vcmask 253952
        %1200 = vst.msk [vmem:[%s249] sm:$0x1] %vm1199, %v720
        %1201 = vst.msk [vmem:[%s255] sm:$0x1] %vm1199, %v1173
        %s1202 = sand.u32 %s102, 1
        %s1203 = scalar_lea.sflag [#allocation4], %s1202
        %s1204 = sand.u32 %s102, 1
        %s1205 = smul.addr %s1204, 8
        %s1206 = scalar_lea.vmem [#allocation5], %s1205
        %s1207 = sand.u32 %s26, 1
        %s1208 = scalar_lea.sflag [#allocation7], %s1207
        %s1209 = sand.u32 %s128, 1
        %s1210 = scalar_lea.vmem [#allocation6], %s1209
        %s1211 = sand.u32 %s26, 1
        %s1212 = scalar_lea.sflag [#allocation7], %s1211
        %s1213 = sand.u32 %s154, 1
        %s1214 = scalar_lea.vmem [#allocation8], %s1213
        // Predicated region
        $region37: #{tpu_custom_call.1} parent=31 // pred_check
          %p1215 = pneg %p112
        $region38: #{tpu_custom_call.1} parent=31 // pred_check_branch
          %1217 = sbr.rel (%p1215) target = $region40
        $region39: #{tpu_custom_call.1} parent=31 // pred_region
          %s1219 = ssub.s32 128, 128
          %1220 = vsyncadd %s1203, %s1219
          %s1221 = smul.addr %s26, 128
          %s1222 = scalar_lea.hbm %s3, %s1221
          %s1224 = sshll.u32 %s1206, 4
          %s1225 = int_to_ptr.vmem [resolvable:$true] %s1224
          %1227 = dma.vmem_to_hbm [thread:$0]  %s1225, 128, %s1222, %s1203
        $region40: #{tpu_custom_call.1} parent=31 // pred_fallthru
          _
        // Predicated region
        $region41: #{tpu_custom_call.1} parent=31 // pred_check
          %p1228 = pneg %p138
        $region42: #{tpu_custom_call.1} parent=31 // pred_check_branch
          %1230 = sbr.rel (%p1228) target = $region44
        $region43: #{tpu_custom_call.1} parent=31 // pred_region
          %s1232 = ssub.s32 16, 16
          %1233 = vsyncadd %s1208, %s1232
          %s1234 = smul.addr %s26, 16
          %s1235 = scalar_lea.hbm %s4, %s1234
          %s1237 = sshll.u32 %s1210, 4
          %s1238 = int_to_ptr.vmem [resolvable:$true] %s1237
          %1240 = dma.vmem_to_hbm [thread:$0]  %s1238, 16, %s1235, %s1208
        $region44: #{tpu_custom_call.1} parent=31 // pred_fallthru
          _
        // Predicated region
        $region45: #{tpu_custom_call.1} parent=31 // pred_check
          %p1241 = pneg %p164
        $region46: #{tpu_custom_call.1} parent=31 // pred_check_branch
          %1243 = sbr.rel (%p1241) target = $region48
        $region47: #{tpu_custom_call.1} parent=31 // pred_region
          %s1245 = ssub.s32 16, 16
          %1246 = vsyncadd %s1212, %s1245
          %s1247 = smul.addr %s26, 16
          %s1248 = scalar_lea.hbm %s5, %s1247
          %s1250 = sshll.u32 %s1214, 4
          %s1251 = int_to_ptr.vmem [resolvable:$true] %s1250
          %1253 = dma.vmem_to_hbm [thread:$0]  %s1251, 16, %s1248, %s1212
        $region48: #{tpu_custom_call.1} parent=31 // pred_fallthru
          _
      $region32: #{tpu_custom_call.1} parent=5 // pred_fallthru
        _
      %p1254 = scmp.le.s32.totalorder 2, %s21
      // Predicated region
      $region49: #{tpu_custom_call.1} parent=5 // pred_check
        %p1255 = pneg %p1254
      $region50: #{tpu_custom_call.1} parent=5 // pred_check_branch
        %1257 = sbr.rel (%p1255) target = $region52
      $region51: #{tpu_custom_call.1} parent=5 // pred_region
        %s1258 = ssub.s32 %s21, 2
        // Predicated region
        $region53: #{tpu_custom_call.1} parent=51 // pred_check
          %p1259 = pneg %p118
        $region54: #{tpu_custom_call.1} parent=51 // pred_check_branch
          %1261 = sbr.rel (%p1259) target = $region56
        $region55: #{tpu_custom_call.1} parent=51 // pred_region
          %s1262 = sand.u32 %s103, 1
          %s1263 = scalar_lea.sflag [#allocation4], %s1262
          %s1264 = sand.u32 %s103, 1
          %s1265 = smul.addr %s1264, 8
          %s1266 = scalar_lea.vmem [#allocation5], %s1265
          %1267 = dma.done %s1263, 128
        $region56: #{tpu_custom_call.1} parent=51 // pred_fallthru
          _
        // Predicated region
        $region57: #{tpu_custom_call.1} parent=51 // pred_check
          %p1268 = pneg %p144
        $region58: #{tpu_custom_call.1} parent=51 // pred_check_branch
          %1270 = sbr.rel (%p1268) target = $region60
        $region59: #{tpu_custom_call.1} parent=51 // pred_region
          %s1271 = sand.u32 %s27, 1
          %s1272 = scalar_lea.sflag [#allocation7], %s1271
          %s1273 = sand.u32 %s129, 1
          %s1274 = scalar_lea.vmem [#allocation6], %s1273
          %1275 = dma.done %s1272, 16
        $region60: #{tpu_custom_call.1} parent=51 // pred_fallthru
          _
        // Predicated region
        $region61: #{tpu_custom_call.1} parent=51 // pred_check
          %p1276 = pneg %p170
        $region62: #{tpu_custom_call.1} parent=51 // pred_check_branch
          %1278 = sbr.rel (%p1276) target = $region64
        $region63: #{tpu_custom_call.1} parent=51 // pred_region
          %s1279 = sand.u32 %s27, 1
          %s1280 = scalar_lea.sflag [#allocation7], %s1279
          %s1281 = sand.u32 %s155, 1
          %s1282 = scalar_lea.vmem [#allocation8], %s1281
          %1283 = dma.done %s1280, 16
        $region64: #{tpu_custom_call.1} parent=51 // pred_fallthru
          _
      $region52: #{tpu_custom_call.1} parent=5 // pred_fallthru
        _
    $region6: #{tpu_custom_call.1} parent=1 // loop_footer
      %s25 = sadd.s32 1, %s21
    $region7: #{tpu_custom_call.1} parent=1 // loop_footer_branch
      %20 = sbr.rel target = $region3
    $region8: #{tpu_custom_call.1} parent=1 // loop_exit
      _
    %1284 = vsyncpa [#allocation3], 1
    %s1285 = scalar_lea.sflag [#allocation3], 1
    %1286 = vsyncpa %s1285, 1
    %1287 = vsyncpa [#allocation4], 1
    %s1288 = scalar_lea.sflag [#allocation4], 1
    %1289 = vsyncpa %s1288, 1
    %1290 = vsyncpa [#allocation7], 1
    %s1291 = scalar_lea.sflag [#allocation7], 1
    %1292 = vsyncpa %s1291, 1

</llo_original>
